<compile_context>
chip_gen: v7x
topology: tpu7x:2x2x1
jax: 0.10.0
libtpu: 0.0.40
codegen_flags: <defaults>
</compile_context>

<pallas_src>
import functools
import math

import jax
import jax.numpy as jnp
from jax import lax
from jax.experimental import pallas as pl
from jax.experimental.pallas import tpu as pltpu


def _pick_tile(dim, target, align):
    """Largest tile t <= target with dim % t == 0 and (t == dim or t % align == 0)."""
    if dim <= target:
        return dim
    t = (target // align) * align
    while t >= align:
        if dim % t == 0:
            return t
        t -= align
    return dim  # no aligned divisor found; fall back to the full dimension


@functools.lru_cache(maxsize=None)
def _vmem_limit_bytes():
    """Per-generation VMEM budget: v7x only has 64 MiB physical per TC."""
    budget = 48 * 1024 * 1024  # safe on every generation
    try:
        cap = pltpu.get_tpu_info().vmem_capacity_bytes
        budget = min(cap - 16 * 1024 * 1024, 112 * 1024 * 1024)
    except Exception:
        pass
    return max(budget, 32 * 1024 * 1024)


# ----------------------------------------------------------------------------
# Kernel 1: tiled fused matmul + bias (c_attn and c_proj)
# ----------------------------------------------------------------------------
def _linear_kernel(x_ref, w_ref, b_ref, o_ref, acc_ref):
    """One (tm, tn) output tile; K (program_id 2) is the reduction axis."""
    k = pl.program_id(2)

    @pl.when(k == 0)
    def _init():
        acc_ref[...] = jnp.zeros_like(acc_ref)

    # x: (tm, tk) bf16, w: (tn, tk) bf16 in PyTorch (out, in) layout -> f32 acc.
    acc_ref[...] += lax.dot_general(
        x_ref[...], w_ref[...],
        dimension_numbers=(((1,), (1,)), ((), ())),
        preferred_element_type=jnp.float32,
    )

    @pl.when(k == pl.num_programs(2) - 1)
    def _finalize():
        o_ref[...] = (acc_ref[...] + b_ref[...]).astype(o_ref.dtype)


def pallas_linear(x2d, w, b, *, out_dtype=jnp.bfloat16,
                  tm_target=1024, tn_target=768, tk_target=1024):
    """y = x2d @ w.T + b, w kept in PyTorch (out_features, in_features) layout."""
    M, K = x2d.shape
    N, K2 = w.shape
    assert K == K2, (x2d.shape, w.shape)
    assert x2d.dtype == w.dtype, (x2d.dtype, w.dtype)

    sub = 16 if x2d.dtype == jnp.bfloat16 else 8       # bf16 sublane packing
    tm = _pick_tile(M, tm_target, sub)
    tn = _pick_tile(N, tn_target, 128)
    tk = _pick_tile(K, tk_target, 128)
    # v7x has 2 TensorCores: try to give the parallel axes at least 2 tiles.
    if (M // tm) * (N // tn) < 2 and tm > sub:
        tm2 = _pick_tile(M, max(sub, tm // 2), sub)
        if (M // tm2) * (N // tn) >= 2:
            tm = tm2
    grid = (M // tm, N // tn, K // tk)

    b2d = b.reshape(1, N).astype(jnp.float32)           # bias added in f32

    in_item = x2d.dtype.itemsize
    cost = pl.CostEstimate(
        flops=2 * M * N * K,
        transcendentals=0,
        # Account for the re-streaming of x (once per N tile) and w (once per
        # M tile), plus the output write and the bias.
        bytes_accessed=(in_item * M * K * grid[1]
                        + in_item * N * K * grid[0]
                        + jnp.dtype(out_dtype).itemsize * M * N
                        + 4 * N),
    )
    return pl.pallas_call(
        _linear_kernel,
        out_shape=jax.ShapeDtypeStruct((M, N), out_dtype),
        grid=grid,
        in_specs=[
            pl.BlockSpec((tm, tk), lambda i, j, k: (i, k)),
            pl.BlockSpec((tn, tk), lambda i, j, k: (j, k)),
            pl.BlockSpec((1, tn), lambda i, j, k: (0, j)),
        ],
        out_specs=pl.BlockSpec((tm, tn), lambda i, j, k: (i, j)),
        scratch_shapes=[pltpu.VMEM((tm, tn), jnp.float32)],
        compiler_params=pltpu.CompilerParams(
            dimension_semantics=("parallel", "parallel", "arbitrary"),
            vmem_limit_bytes=_vmem_limit_bytes(),
        ),
        cost_estimate=cost,
    )(x2d, w, b2d)


# ----------------------------------------------------------------------------
# Kernel 2: flash-style causal attention, all heads of one batch per grid step
# ----------------------------------------------------------------------------
def _flash_attn_kernel(q_ref, k_ref, v_ref, o_ref, m_sc, l_sc, acc_sc, q_sc,
                       *, n_head, head_dim, tq, tkv, scale):
    """Online-softmax attention over one (batch, q-tile); heads batched.

    Blocks: q (1, tq, C), k/v (1, tkv, C), out (1, tq, C); C = n_head*head_dim.
    kv (program_id 2) is the innermost reduction axis.  "q" here is already
    the module-quirk query (the k projection); see the wrapper.
    """
    qi = pl.program_id(1)
    ki = pl.program_id(2)

    @pl.when(ki == 0)
    def _init():
        m_sc[...] = jnp.full_like(m_sc, -jnp.inf)
        l_sc[...] = jnp.zeros_like(l_sc)
        acc_sc[...] = jnp.zeros_like(acc_sc)
        # Split heads ((tq, C) -> (H, tq, D)) once per q tile, and fold the
        # 1/sqrt(D) softmax scale into q here: H*tq*D multiplies once instead
        # of H*tq*tkv multiplies on the score tensor at every kv step.
        q = q_ref[0].reshape(tq, n_head, head_dim)
        q = jnp.transpose(q, (1, 0, 2))                       # (H, tq, D)
        q_sc[...] = (q * scale).astype(q_sc.dtype)

    def _update(apply_mask):
        q = q_sc[...]                                         # (H, tq, D) bf16
        k = jnp.transpose(k_ref[0].reshape(tkv, n_head, head_dim), (1, 0, 2))
        v = jnp.transpose(v_ref[0].reshape(tkv, n_head, head_dim), (1, 0, 2))
        # Batched QK^T contracting the last axes; scores accumulate in f32.
        s = jnp.einsum("hqd,hkd->hqk", q, k,
                       preferred_element_type=jnp.float32)    # (H, tq, tkv)
        if apply_mask:                 # only traced for the diagonal block
            row = qi * tq + lax.broadcasted_iota(jnp.int32, (tq, tkv), 0)
            col = ki * tkv + lax.broadcasted_iota(jnp.int32, (tq, tkv), 1)
            s = jnp.where((col <= row)[None, :, :], s, jnp.float32(-1e30))
        m_prev = m_sc[...]                                    # (H, tq, 1) f32
        m_new = jnp.maximum(m_prev, jnp.max(s, axis=-1, keepdims=True))
        alpha = jnp.exp(m_prev - m_new)
        p = jnp.exp(s - m_new)                                # f32
        l_sc[...] = alpha * l_sc[...] + jnp.sum(p, axis=-1, keepdims=True)
        pv = jnp.einsum("hqk,hkd->hqd", p.astype(v.dtype), v,
                        preferred_element_type=jnp.float32)   # (H, tq, D)
        acc_sc[...] = alpha * acc_sc[...] + pv
        m_sc[...] = m_new

    # Causal structure with tq == tkv:
    #   ki < qi : fully visible block, no mask needed
    #   ki == qi: diagonal block, mask needed; accumulation is complete here
    #   ki > qi : fully masked -> no compute and no DMA (kv index_map clamps
    #             to the diagonal block, so the fetch is elided)
    @pl.when(ki < qi)
    def _full():
        _update(apply_mask=False)

    @pl.when(ki == qi)
    def _diag_and_finalize():
        _update(apply_mask=True)
        # 1/l folded into the final write (exact; runs once per q tile).
        inv_l = pl.reciprocal(l_sc[...], approx=False)        # (H, tq, 1)
        out = (acc_sc[...] * inv_l).astype(o_ref.dtype)       # (H, tq, D)
        # Merge heads: (H, tq, D) -> (tq, H, D) -> (tq, C), i.e. exactly the
        # PyTorch y.transpose(1, 2).contiguous().view(B, T, C) layout, and one
        # lane-dense store instead of H masked 64-lane stores.
        out = jnp.transpose(out, (1, 0, 2)).reshape(tq, n_head * head_dim)
        o_ref[0] = out


def pallas_flash_attention(qkv, n_head, *, tq_target=256):
    """Causal attention over the fused c_attn output.

    qkv: (B, T, 3C) with columns [q_proj | k_proj | v_proj].
    Reproduces the module quirk scaled_dot_product_attention(k, q, v): the
    k projection is the query, the q projection is the key.
    Returns (B, T, C) with heads merged, same dtype as qkv.
    """
    B, T, C3 = qkv.shape
    assert C3 % 3 == 0
    C = C3 // 3
    assert C % n_head == 0
    D = C // n_head

    sub = 16 if qkv.dtype == jnp.bfloat16 else 8
    tq = _pick_tile(T, tq_target, sub)
    # v7x megacore: prefer >= 2 (b, qi) parallel tiles.
    if B * (T // tq) < 2 and tq > sub:
        tq2 = _pick_tile(T, max(sub, tq // 2), sub)
        if B * (T // tq2) >= 2:
            tq = tq2
    tkv = tq                    # equal tiles => only the diagonal block masked
    nq, nkv = T // tq, T // tkv
    scale = 1.0 / math.sqrt(D)

    kernel = functools.partial(_flash_attn_kernel, n_head=n_head, head_dim=D,
                               tq=tq, tkv=tkv, scale=scale)

    if C % 128 == 0:
        # Read q/k/v directly from the fused (B, T, 3C) buffer with
        # column-block index maps: no XLA-level split / head-transpose pass.
        # Column block 1 (k proj) is the query, block 0 (q proj) the key.
        args = (qkv, qkv, qkv)
        q_spec = pl.BlockSpec((1, tq, C), lambda b, qi, ki: (b, qi, 1))
        k_spec = pl.BlockSpec((1, tkv, C),
                              lambda b, qi, ki: (b, jnp.minimum(ki, qi), 0))
        v_spec = pl.BlockSpec((1, tkv, C),
                              lambda b, qi, ki: (b, jnp.minimum(ki, qi), 2))
    else:
        # Tiny / unaligned C: a C-wide column block of the 3C buffer would
        # violate the (8,128) block constraint, so split once in XLA instead.
        qp, kp, vp = jnp.split(qkv, 3, axis=-1)
        args = (kp, qp, vp)                # (query, key, value) with the quirk
        q_spec = pl.BlockSpec((1, tq, C), lambda b, qi, ki: (b, qi, 0))
        k_spec = pl.BlockSpec((1, tkv, C),
                              lambda b, qi, ki: (b, jnp.minimum(ki, qi), 0))
        v_spec = pl.BlockSpec((1, tkv, C),
                              lambda b, qi, ki: (b, jnp.minimum(ki, qi), 0))

    o_spec = pl.BlockSpec((1, tq, C), lambda b, qi, ki: (b, qi, 0))

    item = qkv.dtype.itemsize
    kv_reads = B * C * tkv * (nq * (nq + 1) // 2)   # per tensor, with the clamp
    cost = pl.CostEstimate(
        flops=2 * B * n_head * T * T * D,           # QK^T + PV over causal half
        transcendentals=B * n_head * T * T // 2,    # exp
        bytes_accessed=item * (2 * B * T * C + 2 * kv_reads),
    )
    return pl.pallas_call(
        kernel,
        out_shape=jax.ShapeDtypeStruct((B, T, C), qkv.dtype),
        grid=(B, nq, nkv),
        in_specs=[q_spec, k_spec, v_spec],
        out_specs=o_spec,
        scratch_shapes=[
            pltpu.VMEM((n_head, tq, 1), jnp.float32),   # running max m
            pltpu.VMEM((n_head, tq, 1), jnp.float32),   # running denominator l
            pltpu.VMEM((n_head, tq, D), jnp.float32),   # running numerator acc
            pltpu.VMEM((n_head, tq, D), qkv.dtype),     # pre-scaled q tile
        ],
        compiler_params=pltpu.CompilerParams(
            dimension_semantics=("parallel", "parallel", "arbitrary"),
            vmem_limit_bytes=_vmem_limit_bytes(),
        ),
        cost_estimate=cost,
    )(*args)


# ----------------------------------------------------------------------------
# Module forward (glue in plain JAX, hot paths in Pallas)
# ----------------------------------------------------------------------------
def causal_self_attention(x, params, n_head):
    """Forward of nanoGPT CausalSelfAttention (including its k/q swap quirk).

    Hot datapath in bf16, accumulation / softmax math in f32, output in f32.
    """
    B, T, C = x.shape
    # In a real model the parameters would already live in bf16; here they are
    # cast once at the boundary (cheap relative to the matmuls).
    x_bf = x.astype(jnp.bfloat16)
    w_attn = params["w_attn"].astype(jnp.bfloat16)
    w_proj = params["w_proj"].astype(jnp.bfloat16)

    # qkv = x @ W_attn^T + b_attn (weights stay in PyTorch (out, in) layout).
    qkv = pallas_linear(x_bf.reshape(B * T, C), w_attn, params["b_attn"],
                        out_dtype=jnp.bfloat16)
    qkv = qkv.reshape(B, T, 3 * C)

    # Attention consumes the fused qkv buffer directly (head split in VMEM)
    # and emits (B, T, C) with heads already merged -> no XLA transpose pass.
    y = pallas_flash_attention(qkv, n_head)

    y = pallas_linear(y.reshape(B * T, C), w_proj, params["b_proj"],
                      out_dtype=jnp.float32)
    return y.reshape(B, T, C)


# ----------------------------------------------------------------------------
# Pure-JAX reference for a sanity check
# ----------------------------------------------------------------------------
def _reference(x, params, n_head):
    with jax.default_matmul_precision("highest"):
        B, T, C = x.shape
        hd = C // n_head
        qkv = x @ params["w_attn"].T + params["b_attn"]
        q, k, v = jnp.split(qkv, 3, axis=2)
        rs = lambda t: t.reshape(B, T, n_head, hd).transpose(0, 2, 1, 3)
        q, k, v = rs(q), rs(k), rs(v)
        # query = k, key = q (module quirk)
        s = (k @ q.transpose(0, 1, 3, 2)) / math.sqrt(hd)
        mask = jnp.tril(jnp.ones((T, T), dtype=bool))
        s = jnp.where(mask[None, None], s, -jnp.inf)
        p = jax.nn.softmax(s, axis=-1)
        y = p @ v
        y = y.transpose(0, 2, 1, 3).reshape(B, T, C)
        return y @ params["w_proj"].T + params["b_proj"]


def _make_inputs(key, B, T, C):
    kx, k1, k2, k3, k4 = jax.random.split(key, 5)
    x = jax.random.normal(kx, (B, T, C), dtype=jnp.float32)
    params = {
        "w_attn": 0.02 * jax.random.normal(k1, (3 * C, C), dtype=jnp.float32),
        "b_attn": 0.02 * jax.random.normal(k2, (3 * C,), dtype=jnp.float32),
        "w_proj": 0.02 * jax.random.normal(k3, (C, C), dtype=jnp.float32),
        "b_proj": 0.02 * jax.random.normal(k4, (C,), dtype=jnp.float32),
    }
    return x, params


def _check(y, y_ref, tol=4e-2):
    # bf16 datapath with f32 accumulation: compare at a bf16-appropriate,
    # scale-relative tolerance (real bugs produce O(1)-relative errors).
    err = float(jnp.max(jnp.abs(y.astype(jnp.float32) - y_ref)))
    ref = float(jnp.max(jnp.abs(y_ref))) + 1e-6
    assert err <= tol * ref, (err, ref)


if __name__ == "__main__":
    key = jax.random.PRNGKey(0)
    k_small, k_tiled = jax.random.split(key)

    # 1) Small config matching the module defaults: B=2, T=8, C=32, H=4 (hd=8).
    #    (C is not a multiple of 128 -> exercises the split fallback path.)
    B, T, C, n_head = 2, 8, 32, 4
    x, params = _make_inputs(k_small, B, T, C)
    y = jax.block_until_ready(causal_self_attention(x, params, n_head))
    assert y.shape == (B, T, C)
    _check(y, _reference(x, params, n_head))

    # 2) Larger config exercising the fused qkv column-block reads, the 2x2
    #    causal q/kv tile grid (incl. block skipping) and multi-tile linears.
    B2, T2, C2, n_head2 = 1, 256, 128, 4
    x2, params2 = _make_inputs(k_tiled, B2, T2, C2)
    y2 = jax.block_until_ready(causal_self_attention(x2, params2, n_head2))
    assert y2.shape == (B2, T2, C2)
    _check(y2, _reference(x2, params2, n_head2))

    print("KERNEL_OK")
</pallas_src>

<mosaic_0001>
module attributes {stable_mosaic.version = 11 : i64} {
  func.func @_linear_kernel(%arg0: i32, %arg1: i32, %arg2: i32, %arg3: memref<16x32xbf16, #tpu.memory_space<vmem>>, %arg4: memref<96x32xbf16, #tpu.memory_space<vmem>>, %arg5: memref<1x96xf32, #tpu.memory_space<vmem>>, %arg6: memref<16x96xbf16, #tpu.memory_space<vmem>>, %arg7: memref<16x96xf32, #tpu.memory_space<vmem>>) attributes {dimension_semantics = [#tpu.dimension_semantics<parallel>, #tpu.dimension_semantics<parallel>, #tpu.dimension_semantics<arbitrary>], iteration_bounds = array<i64: 1, 1, 1>, scalar_prefetch = 0 : i64, scratch_operands = 1 : i64, tpu.core_type = #tpu.core_type<tc>, window_params = [{transform_indices = @transform_0, window_bounds = array<i64: 16, 32>}, {transform_indices = @transform_1, window_bounds = array<i64: 96, 32>}, {transform_indices = @transform_2, window_bounds = array<i64: 1, 96>}, {transform_indices = @transform_3, window_bounds = array<i64: 16, 96>}]} {
    %c0_i32 = arith.constant 0 : i32
    %0 = arith.cmpi eq, %arg2, %c0_i32 : i32
    %1 = arith.extui %0 : i1 to i32
    %c0_i32_0 = arith.constant 0 : i32
    %2 = arith.cmpi ne, %1, %c0_i32_0 : i32
    scf.if %2 {
      %cst_10 = arith.constant 0.000000e+00 : f32
      %12 = vector.broadcast %cst_10 : f32 to vector<16x96xf32>
      %c0_11 = arith.constant 0 : index
      %c0_12 = arith.constant 0 : index
      %13 = vector.load %arg7[%c0_11, %c0_12] : memref<16x96xf32, #tpu.memory_space<vmem>>, vector<16x96xf32>
      tpu.vector_store %arg7[%c0_11, %c0_12], %12 {strides = array<i32>} : memref<16x96xf32, #tpu.memory_space<vmem>>, vector<16x96xf32>,
    } else {
    }
    %c0 = arith.constant 0 : index
    %c0_1 = arith.constant 0 : index
    %3 = vector.load %arg7[%c0, %c0_1] : memref<16x96xf32, #tpu.memory_space<vmem>>, vector<16x96xf32>
    %c0_2 = arith.constant 0 : index
    %c0_3 = arith.constant 0 : index
    %4 = vector.load %arg3[%c0_2, %c0_3] : memref<16x32xbf16, #tpu.memory_space<vmem>>, vector<16x32xbf16>
    %c0_4 = arith.constant 0 : index
    %c0_5 = arith.constant 0 : index
    %5 = vector.load %arg4[%c0_4, %c0_5] : memref<96x32xbf16, #tpu.memory_space<vmem>>, vector<96x32xbf16>
    %cst = arith.constant dense<0.000000e+00> : vector<16x96xf32>
    %6 = tpu.matmul %4, %5, %cst {dimension_numbers = #tpu.dot_dimension_numbers<[1], [1], [0], [0], [0, 0, 1, 0], [], []>} : vector<16x32xbf16>, vector<96x32xbf16>, vector<16x96xf32> -> vector<16x96xf32>
    %7 = arith.addf %3, %6 : vector<16x96xf32>
    %c0_6 = arith.constant 0 : index
    %c0_7 = arith.constant 0 : index
    %8 = vector.load %arg7[%c0_6, %c0_7] : memref<16x96xf32, #tpu.memory_space<vmem>>, vector<16x96xf32>
    tpu.vector_store %arg7[%c0_6, %c0_7], %7 {strides = array<i32>} : memref<16x96xf32, #tpu.memory_space<vmem>>, vector<16x96xf32>,
    %c0_i32_8 = arith.constant 0 : i32
    %9 = arith.cmpi eq, %arg2, %c0_i32_8 : i32
    %10 = arith.extui %9 : i1 to i32
    %c0_i32_9 = arith.constant 0 : i32
    %11 = arith.cmpi ne, %10, %c0_i32_9 : i32
    scf.if %11 {
      %c0_10 = arith.constant 0 : index
      %c0_11 = arith.constant 0 : index
      %12 = vector.load %arg7[%c0_10, %c0_11] : memref<16x96xf32, #tpu.memory_space<vmem>>, vector<16x96xf32>
      %c0_12 = arith.constant 0 : index
      %c0_13 = arith.constant 0 : index
      %13 = vector.load %arg5[%c0_12, %c0_13] : memref<1x96xf32, #tpu.memory_space<vmem>>, vector<1x96xf32>
      %14 = vector.broadcast %13 : vector<1x96xf32> to vector<16x96xf32>
      %15 = arith.addf %12, %14 : vector<16x96xf32>
      %16 = arith.truncf %15 : vector<16x96xf32> to vector<16x96xbf16>
      %c0_14 = arith.constant 0 : index
      %c0_15 = arith.constant 0 : index
      %17 = vector.load %arg6[%c0_14, %c0_15] : memref<16x96xbf16, #tpu.memory_space<vmem>>, vector<16x96xbf16>
      tpu.vector_store %arg6[%c0_14, %c0_15], %16 {strides = array<i32>} : memref<16x96xbf16, #tpu.memory_space<vmem>>, vector<16x96xbf16>,
    } else {
    }
    return
  }
  func.func @transform_0(%arg0: i32, %arg1: i32, %arg2: i32) -> (i32, i32) {
    %c0_i32 = arith.constant 0 : i32
    return %arg0, %arg2 : i32, i32
  }
  func.func @transform_1(%arg0: i32, %arg1: i32, %arg2: i32) -> (i32, i32) {
    %c0_i32 = arith.constant 0 : i32
    return %arg1, %arg2 : i32, i32
  }
  func.func @transform_2(%arg0: i32, %arg1: i32, %arg2: i32) -> (i32, i32) {
    %c0_i32 = arith.constant 0 : i32
    %c0_i32_0 = arith.constant 0 : i32
    return %c0_i32, %arg1 : i32, i32
  }
  func.func @transform_3(%arg0: i32, %arg1: i32, %arg2: i32) -> (i32, i32) {
    %c0_i32 = arith.constant 0 : i32
    return %arg0, %arg1 : i32, i32
  }
}

</mosaic_0001>

<llo_original>
// kernel: tpu_custom_call.1
$region0: #{tpu_custom_call.1}
  #allocation0 [shape = 'u32[]', space=smem, size = 0x4, offset = 0x4, fixed_abs, tag = 'smem constant byte address 0x4 - core index']
  #allocation1 [shape = 'u32[144,128]{1,0:T(1,128)}', space=vmem, size = 0x12000, scoped, tag = 'internal scratch']
  #allocation2 [shape = 'f32[16,96]{1,0:T(8,128)}', space=vmem, size = 0x2000, scoped, tag = 'scratch operand']
  %s0 = inlined_call_operand.vmem [shape: bf16[16,32], index: 0, kind: input, shape index: {}]
  %s1 = inlined_call_operand.vmem [shape: bf16[96,32], index: 1, kind: input, shape index: {}]
  %s2 = inlined_call_operand.vmem [shape: f32[1,96], index: 2, kind: input, shape index: {}]
  %s3 = inlined_call_operand.hbm [shape: bf16[16,96], index: 3, kind: output, shape index: {}]
  %s4 = sld [smem:[#allocation0]]
  $region30: #{tpu_custom_call.1} parent=0
    _
  %s6 = ssub.s32 1, %s4
  %s7 = scalar_select 0, %s6, %s4
  $region1: #{tpu_custom_call.1} parent=0
    #allocation3 [shape = 'u8[4096]{0}', space=vmem, size = 0x1000, scoped, tag = 'output window, operand 0, single buffered']
    #allocation4 [shape = 's32[1]{0}', space=sflag, size = 0x4, scoped, tag = 'scoped memory for tpu_custom_call.1']
    %8 = vsyncpa [#allocation4], 0
    // Predicated region
    $region2: #{tpu_custom_call.1} parent=1 // pred_check
      _
    $region3: #{tpu_custom_call.1} parent=1 // pred_check_branch
      %10 = sbr.rel (0) target = $region5
    $region4: #{tpu_custom_call.1} parent=1 // pred_region
      _
    $region5: #{tpu_custom_call.1} parent=1 // pred_fallthru
      _
    // Predicated region
    $region6: #{tpu_custom_call.1} parent=1 // pred_check
      _
    $region7: #{tpu_custom_call.1} parent=1 // pred_check_branch
      %12 = sbr.rel (0) target = $region9
    $region8: #{tpu_custom_call.1} parent=1 // pred_region
      _
    $region9: #{tpu_custom_call.1} parent=1 // pred_fallthru
      _
    // Predicated region
    $region10: #{tpu_custom_call.1} parent=1 // pred_check
      _
    $region11: #{tpu_custom_call.1} parent=1 // pred_check_branch
      %14 = sbr.rel (0) target = $region13
    $region12: #{tpu_custom_call.1} parent=1 // pred_region
      _
    $region13: #{tpu_custom_call.1} parent=1 // pred_fallthru
      _
    %p16 = scmp.eq.s32.totalorder 0, 0
    // Predicated region
    $region14: #{tpu_custom_call.1} parent=1 // pred_check
      %p17 = pneg %p16
    $region15: #{tpu_custom_call.1} parent=1 // pred_check_branch
      %19 = sbr.rel (%p17) target = $region17
    $region16: #{tpu_custom_call.1} parent=1 // pred_region
      %vm20 = vcmask 785408
      %21 = vst.msk [vmem:[#allocation2] sm:$0xff] %vm20, 0.0
      %22 = vst.msk [vmem:[#allocation2 + $0x8] sm:$0xff] %vm20, 0.0
    $region17: #{tpu_custom_call.1} parent=1 // pred_fallthru
      _
    %v23 = vld [vmem:[#allocation2] sm:$0xff]
    %v24 = vld [vmem:[#allocation2 + $0x8] sm:$0xff]
    %v25 = vld [vmem:[%s0] sm:$0xf]
    %v26 = vld [vmem:[%s0 + $0x4] sm:$0xf]
    %v27 = vld [vmem:[%s1] sm:$0xf]
    %v28 = vld [vmem:[%s1 + $0x4] sm:$0xf]
    %v29 = vld [vmem:[%s1 + $0x8] sm:$0xf]
    %v30 = vld [vmem:[%s1 + $0xc] sm:$0xf]
    %v31 = vld [vmem:[%s1 + $0x10] sm:$0xf]
    %v32 = vld [vmem:[%s1 + $0x14] sm:$0xf]
    %v33 = vld [vmem:[%s1 + $0x18] sm:$0xf]
    %v34 = vld [vmem:[%s1 + $0x1c] sm:$0xf]
    %v35 = vld [vmem:[%s1 + $0x20] sm:$0xf]
    %v36 = vld [vmem:[%s1 + $0x24] sm:$0xf]
    %v37 = vld [vmem:[%s1 + $0x28] sm:$0xf]
    %v38 = vld [vmem:[%s1 + $0x2c] sm:$0xf]
    %v41 = vunpack.c.l.b16 %v25
    %v42 = vunpack.c.l.b16 %v26
    %v43 = vpack.c.b16 %v42, %v41
    %v56 = vunpack.c.l.b16 %v27
    %v57 = vunpack.c.l.b16 %v28
    %v58 = vunpack.c.l.b16 %v29
    %v59 = vunpack.c.l.b16 %v30
    %v60 = vunpack.c.l.b16 %v31
    %v61 = vunpack.c.l.b16 %v32
    %v62 = vunpack.c.l.b16 %v33
    %v63 = vunpack.c.l.b16 %v34
    %v64 = vunpack.c.l.b16 %v35
    %v65 = vunpack.c.l.b16 %v36
    %v66 = vunpack.c.l.b16 %v37
    %v67 = vunpack.c.l.b16 %v38
    %v68 = vpack.c.b16 %v57, %v56
    %v69 = vpack.c.b16 %v59, %v58
    %v70 = vpack.c.b16 %v61, %v60
    %v71 = vpack.c.b16 %v63, %v62
    %v72 = vpack.c.b16 %v65, %v64
    %v73 = vpack.c.b16 %v67, %v66
    %vm74 = vcmask 261120
    %v76 = vsel %vm74, %v43, 0
    %v79 = vsel %vm74, %v68, 0
    %v82 = vsel %vm74, %v69, 0
    %v85 = vsel %vm74, %v70, 0
    %v88 = vsel %vm74, %v71, 0
    %v91 = vsel %vm74, %v72, 0
    %v94 = vsel %vm74, %v73, 0
    %96 = vmatprep.subr.bf16.mxu0 0
    %97 = vmatpush1.bf16.xpose.msra.mxu0 %v79
    %98 = vmatprep.subr.bf16.mxu0 0
    %99 = vmatpush1.bf16.xpose.msra.mxu0 %v82
    %100 = vmatprep.subr.bf16.mxu0 0
    %101 = vmatpush1.bf16.xpose.msra.mxu0 %v85
    %102 = vmatprep.subr.bf16.mxu0 0
    %103 = vmatpush1.bf16.xpose.msra.mxu0 %v88
    %104 = vmatprep.subr.bf16.mxu0 0
    %105 = vmatpush1.bf16.xpose.msra.mxu0 %v91
    %106 = vmatprep.subr.bf16.mxu0 0
    %107 = vmatpush1.bf16.xpose.msra.mxu0 %v94
    %108 = vmatprep.subr.bf16.mxu0 0
    %109 = vmatpush1.bf16.xpose.msra.mxu0 0
    %110 = vmatprep.subr.bf16.mxu0 0
    %111 = vmatpush1.bf16.xpose.msra.mxu0 0
    %112 = vmatprep.subr.bf16.mxu0 0
    %113 = vmatpush1.bf16.xpose.msra.mxu0 0
    %114 = vmatprep.subr.bf16.mxu0 0
    %115 = vmatpush1.bf16.xpose.msra.mxu0 0
    %116 = vmatprep.subr.bf16.mxu0 0
    %117 = vmatpush1.bf16.xpose.msra.mxu0 0
    %118 = vmatprep.subr.bf16.mxu0 0
    %119 = vmatpush1.bf16.xpose.msra.mxu0 0
    %120 = vmatprep.subr.bf16.mxu0 0
    %121 = vmatpush1.bf16.xpose.msra.mxu0 0
    %122 = vmatprep.subr.bf16.mxu0 0
    %123 = vmatpush1.bf16.xpose.msra.mxu0 0
    %124 = vmatprep.subr.bf16.mxu0 0
    %125 = vmatpush1.bf16.xpose.msra.mxu0 0
    %126 = vmatprep.subr.bf16.mxu0 0
    %127 = vmatpush1.bf16.xpose.msra.mxu0 0
    %128 = vmatprep.mubr.bf16.mxu0 0
    %129 = vmatmul.mubr.bf16.gmra.mrb[0].mxu0 %v76
    %v130 = vpop.f32.mrb[0].mxu0
    %v131 = vadd.f32 0.0, %v130
    %v132 = vpop.f32.mrb[0].mxu0
    %v133 = vpop.f32.mrb[0].mxu0
    %v134 = vadd.f32 0.0, %v133
    %v135 = vpop.f32.mrb[0].mxu0
    %136 = vdwg.mxu0
    %v137 = vadd.f32 %v23, %v131
    %v138 = vadd.f32 %v24, %v134
    %vm139 = vcmask 785408
    %140 = vst.msk [vmem:[#allocation2] sm:$0xff] %vm139, %v137
    %141 = vst.msk [vmem:[#allocation2 + $0x8] sm:$0xff] %vm139, %v138
    // Predicated region
    $region18: #{tpu_custom_call.1} parent=1 // pred_check
      %p142 = pneg %p16
    $region19: #{tpu_custom_call.1} parent=1 // pred_check_branch
      %144 = sbr.rel (%p142) target = $region21
    $region20: #{tpu_custom_call.1} parent=1 // pred_region
      %v145 = vld [vmem:[#allocation2] sm:$0xff]
      %v146 = vld [vmem:[#allocation2 + $0x8] sm:$0xff]
      %v147 = vld [vmem:[%s2] sm:$0x1]
      %v149 = vlaneseq
      %v150 = vshrl.u32 %v149, 7
      %v151 = vsub.s32 0, %v150
      %v152 = vrot.slane %v147, %v151
      %v154 = vadd.f32 %v145, %v152
      %v155 = vadd.f32 %v146, %v152
      %v156 = vpack.c.bf16 %v155, %v154
      %v158 = vunpack.c.l.b16 %v156
      %v159 = vunpack.c.h.b16 %v156
      %v160 = vpack.c.b16 %v158, %v158
      %v161 = vpack.c.b16 %v159, %v159
      %vm164 = vcmask 781312
      %165 = vst.msk [vmem:[#allocation3] sm:$0xf] %vm164, %v160
      %166 = vst.msk [vmem:[#allocation3 + $0x4] sm:$0xf] %vm164, %v161
    $region21: #{tpu_custom_call.1} parent=1 // pred_fallthru
      _
    // Predicated region
    $region22: #{tpu_custom_call.1} parent=1 // pred_check
      _
    $region23: #{tpu_custom_call.1} parent=1 // pred_check_branch
      %168 = sbr.rel (0) target = $region25
    $region24: #{tpu_custom_call.1} parent=1 // pred_region
      %s170 = ssub.s32 128, 128
      %171 = vsyncadd [#allocation4], %s170
      %s172 = sshll.u32 [#allocation3], 4
      %s173 = int_to_ptr.vmem [resolvable:$true] %s172
      %178 = dma.vmem_to_hbm [thread:$0]  %s173, 128, %s3, [#allocation4], 64, 64, 4
    $region25: #{tpu_custom_call.1} parent=1 // pred_fallthru
      _
    // Predicated region
    $region26: #{tpu_custom_call.1} parent=1 // pred_check
      _
    $region27: #{tpu_custom_call.1} parent=1 // pred_check_branch
      %180 = sbr.rel (0) target = $region29
    $region28: #{tpu_custom_call.1} parent=1 // pred_region
      %181 = dma.done [#allocation4], 128
    $region29: #{tpu_custom_call.1} parent=1 // pred_fallthru
      _
    %182 = vsyncpa [#allocation4], 1

</llo_original>
